<compile_context>
chip_gen: v7x
topology: tpu7x:2x2x1
jax: 0.10.0
libtpu: 0.0.40
codegen_flags: <defaults>
</compile_context>

<pallas_src>
import functools

import numpy as np
import jax
import jax.numpy as jnp
from jax.experimental import pallas as pl
from jax.experimental.pallas import tpu as pltpu

CIN, COUT = 4, 1
KH, KW = 2, 3
SH, SW = 3, 1
PH, PW = 1, 3

# The stride-phase decomposition below (kh=1 -> oh=3g, bias-only -> oh=3g+1,
# kh=0 -> oh=3g+2; wi = ow + s, s = KW - kw) is hard-wired to these constants.
assert (SH, SW, KH, KW, PH, PW) == (3, 1, 2, 3, 1, 3), "phase decomposition hard-wired"

_C0 = 0.5
_C1 = 0.044715
_C2 = 0.7978845608028654


def _gelu_tanh_epilogue(v1):
    # exactly the ops of the PyTorch forward
    v2 = v1 * _C0
    v3 = v1 * v1 * v1
    v5 = v1 + v3 * _C1
    v7 = jnp.tanh(v5 * _C2)
    return v2 * (v7 + 1.0)


def _convt_gelu_kernel(w_ref, c_ref, x_ref, o_ref, *, cin, hin, lb):
    # w_ref: (cin*KH*KW,) f32 SMEM  -- weight[ci, 0, kh, kw] flattened row-major
    # c_ref: (2,) f32 SMEM          -- [bias, gelu_epilogue(bias)]
    # x_ref: (cin, hin, lb + pad) f32 VMEM -- batch chunk packed on the lane axis
    # o_ref: (3, hin-1, lb) f32 VMEM       -- phase-separated output planes
    x = x_ref[...]                      # (cin, hin, lb + pad)
    bias = c_ref[0]
    bias_ep = c_ref[1]                  # epilogue(bias), precomputed in wrapper
    G = hin - 1

    # Hoist all 2*cin*KW weight scalars out of the accumulation loop.
    # index = ci*KH*KW + kh*KW + kw ; kw = KW - s for s in {1,2,3}.
    w_a = [[w_ref[ci * KH * KW + 1 * KW + (KW - s)] for s in (1, 2, 3)]
           for ci in range(cin)]        # kh = 1 taps
    w_b = [[w_ref[ci * KH * KW + 0 * KW + (KW - s)] for s in (1, 2, 3)]
           for ci in range(cin)]        # kh = 0 taps

    acc_a = jnp.zeros((hin, lb), jnp.float32)   # kh=1 taps -> output rows 3*hi
    acc_b = jnp.zeros((hin, lb), jnp.float32)   # kh=0 taps -> output rows 3*hi-1
    # ow = wi - PW + kw  =>  wi = ow + s with s = KW - kw in {1,2,3}
    for si, s in enumerate((1, 2, 3)):
        xs = x[:, :, s:s + lb]          # one lane shift per s, shared by all taps
        for ci in range(cin):
            plane = xs[ci]
            acc_a = acc_a + plane * w_a[ci][si]
            acc_b = acc_b + plane * w_b[ci][si]

    # phase 0: oh = 3g     <- acc_a[g],   g in [0, G)
    # phase 1: oh = 3g + 1 <- bias only: constant fill, no tanh
    # phase 2: oh = 3g + 2 <- acc_b[g+1]
    o_ref[0, :, :] = _gelu_tanh_epilogue(acc_a[0:G, :] + bias)
    o_ref[1, :, :] = jnp.full((G, lb), bias_ep, jnp.float32)
    o_ref[2, :, :] = _gelu_tanh_epilogue(acc_b[1:hin, :] + bias)


def conv_transpose_gelu(x, weight, bias):
    """x: (N, CIN, H, W); weight: (CIN, COUT, KH, KW); bias: (COUT,)."""
    n, cin, hin, win = x.shape
    assert cin == CIN and weight.shape == (CIN, COUT, KH, KW)
    ho = (hin - 1) * SH - 2 * PH + (KH - 1) + 1   # = 3*(hin-1)
    wo = (win - 1) * SW - 2 * PW + (KW - 1) + 1   # = win - 4
    assert ho > 0 and wo > 0, "invalid conv-transpose output size"
    G = hin - 1
    assert ho == 3 * G

    # One big grid step (fold the whole batch), or two steps when the batch is
    # large enough to keep both v7x TensorCores busy.
    gsteps = 2 if (n >= 4 and n % 2 == 0) else 1
    nb = n // gsteps
    lb = nb * win                 # useful lanes per step (batch packed on lanes)
    padw = 8                      # >= KW, so all tap slices stay in-bounds
    lb_in = lb + padw

    x = x.astype(jnp.float32)
    # Pack each batch chunk onto the lane axis: (gsteps, cin, hin, nb*win) + pad.
    xp = x.reshape(gsteps, nb, cin, hin, win)
    xp = jnp.transpose(xp, (0, 2, 3, 1, 4)).reshape(gsteps, cin, hin, lb)
    xp = jnp.pad(xp, ((0, 0), (0, 0), (0, 0), (0, padw)))

    w_flat = weight[:, 0, :, :].reshape(-1).astype(jnp.float32)   # (cin*KH*KW,)
    b0 = bias.astype(jnp.float32)[0]
    consts = jnp.stack([b0, _gelu_tanh_epilogue(b0)])             # (2,)

    kern = functools.partial(_convt_gelu_kernel, cin=cin, hin=hin, lb=lb)

    n_out = gsteps * 3 * G * lb
    n_ep = gsteps * 2 * G * lb    # elements that actually run the epilogue
    cost = pl.CostEstimate(
        flops=gsteps * (2 * 2 * cin * KW * hin * lb) + 10 * n_ep,
        transcendentals=n_ep,
        bytes_accessed=4 * (xp.size + w_flat.size + 2 + n_out))

    out = pl.pallas_call(
        kern,
        out_shape=jax.ShapeDtypeStruct((gsteps, 3, G, lb), jnp.float32),
        grid=(gsteps,),
        in_specs=[
            pl.BlockSpec(memory_space=pltpu.MemorySpace.SMEM),    # weights
            pl.BlockSpec(memory_space=pltpu.MemorySpace.SMEM),    # bias consts
            pl.BlockSpec((None, cin, hin, lb_in), lambda i: (i, 0, 0, 0)),
        ],
        out_specs=pl.BlockSpec((None, 3, G, lb), lambda i: (i, 0, 0, 0)),
        compiler_params=pltpu.CompilerParams(
            dimension_semantics=("parallel",)),
        cost_estimate=cost,
    )(w_flat, consts, xp)

    # Layout plumbing only: unpack lanes and interleave the 3 phase planes into
    # output rows (oh = 3*g + phase), then drop the per-image garbage columns.
    out = out.reshape(gsteps, 3, G, nb, win)
    out = jnp.transpose(out, (0, 3, 2, 1, 4))       # (gsteps, nb, G, 3, win)
    out = out.reshape(n, ho, win)[:, :, :wo]
    return out.reshape(n, 1, ho, wo)


def _reference(x, w, b):
    """Direct PyTorch ConvTranspose2d semantics + epilogue, in numpy."""
    n, cin, hin, win = x.shape
    ho = (hin - 1) * SH - 2 * PH + (KH - 1) + 1
    wo = (win - 1) * SW - 2 * PW + (KW - 1) + 1
    v1 = np.zeros((n, COUT, ho, wo), np.float32)
    for nn in range(n):
        for ci in range(cin):
            for co in range(COUT):
                for hi in range(hin):
                    for wi in range(win):
                        for kh in range(KH):
                            for kw in range(KW):
                                oh = hi * SH - PH + kh
                                ow = wi * SW - PW + kw
                                if 0 <= oh < ho and 0 <= ow < wo:
                                    v1[nn, co, oh, ow] += (
                                        x[nn, ci, hi, wi] * w[ci, co, kh, kw])
    v1 += b.reshape(1, COUT, 1, 1)
    v2 = v1 * 0.5
    v3 = v1 * v1 * v1
    v5 = v1 + v3 * 0.044715
    v7 = np.tanh(v5 * 0.7978845608028654)
    return v2 * (v7 + 1.0)


if __name__ == "__main__":
    key = jax.random.PRNGKey(0)
    kx, kw_key, kb_key = jax.random.split(key, 3)

    N, H, W = 2, 16, 16
    x = jax.random.normal(kx, (N, CIN, H, W), dtype=jnp.float32)

    # deterministic ConvTranspose2d-style init (uniform +- 1/sqrt(fan_in))
    fan_in = CIN * KH * KW
    bound = 1.0 / float(np.sqrt(fan_in))
    weight = jax.random.uniform(kw_key, (CIN, COUT, KH, KW), jnp.float32,
                                -bound, bound)
    bias = jax.random.uniform(kb_key, (COUT,), jnp.float32, -bound, bound)

    out = jax.block_until_ready(conv_transpose_gelu(x, weight, bias))

    ref = _reference(np.asarray(x), np.asarray(weight), np.asarray(bias))
    assert out.shape == ref.shape, (out.shape, ref.shape)
    np.testing.assert_allclose(np.asarray(out), ref, rtol=1e-4, atol=1e-5)
    print("KERNEL_OK")
</pallas_src>

<mosaic_0001>
module attributes {stable_mosaic.version = 11 : i64} {
  func.func @_convt_gelu_kernel(%arg0: i32, %arg1: memref<24xf32, #tpu.memory_space<smem>>, %arg2: memref<2xf32, #tpu.memory_space<smem>>, %arg3: memref<1x4x16x40xf32, #tpu.memory_space<vmem>>, %arg4: memref<1x3x15x32xf32, #tpu.memory_space<vmem>>) attributes {dimension_semantics = [#tpu.dimension_semantics<parallel>], iteration_bounds = array<i64: 1>, scalar_prefetch = 0 : i64, scratch_operands = 0 : i64, tpu.core_type = #tpu.core_type<tc>, window_params = [{transform_indices = @transform_0, window_bounds = array<i64: 24>}, {transform_indices = @transform_1, window_bounds = array<i64: 2>}, {transform_indices = @transform_2, window_bounds = array<i64: 1, 4, 16, 40>}, {transform_indices = @transform_3, window_bounds = array<i64: 1, 3, 15, 32>}]} {
    %c0 = arith.constant 0 : index
    %c0_0 = arith.constant 0 : index
    %c0_1 = arith.constant 0 : index
    %c0_2 = arith.constant 0 : index
    %0 = vector.load %arg3[%c0, %c0_0, %c0_1, %c0_2] : memref<1x4x16x40xf32, #tpu.memory_space<vmem>>, vector<1x4x16x40xf32>
    %1 = vector.shape_cast %0 : vector<1x4x16x40xf32> to vector<4x16x40xf32>
    %c0_3 = arith.constant 0 : index
    %2 = memref.load %arg2[%c0_3] : memref<2xf32, #tpu.memory_space<smem>>
    %c1 = arith.constant 1 : index
    %3 = memref.load %arg2[%c1] : memref<2xf32, #tpu.memory_space<smem>>
    %c5 = arith.constant 5 : index
    %4 = memref.load %arg1[%c5] : memref<24xf32, #tpu.memory_space<smem>>
    %c4 = arith.constant 4 : index
    %5 = memref.load %arg1[%c4] : memref<24xf32, #tpu.memory_space<smem>>
    %c3 = arith.constant 3 : index
    %6 = memref.load %arg1[%c3] : memref<24xf32, #tpu.memory_space<smem>>
    %c11 = arith.constant 11 : index
    %7 = memref.load %arg1[%c11] : memref<24xf32, #tpu.memory_space<smem>>
    %c10 = arith.constant 10 : index
    %8 = memref.load %arg1[%c10] : memref<24xf32, #tpu.memory_space<smem>>
    %c9 = arith.constant 9 : index
    %9 = memref.load %arg1[%c9] : memref<24xf32, #tpu.memory_space<smem>>
    %c17 = arith.constant 17 : index
    %10 = memref.load %arg1[%c17] : memref<24xf32, #tpu.memory_space<smem>>
    %c16 = arith.constant 16 : index
    %11 = memref.load %arg1[%c16] : memref<24xf32, #tpu.memory_space<smem>>
    %c15 = arith.constant 15 : index
    %12 = memref.load %arg1[%c15] : memref<24xf32, #tpu.memory_space<smem>>
    %c23 = arith.constant 23 : index
    %13 = memref.load %arg1[%c23] : memref<24xf32, #tpu.memory_space<smem>>
    %c22 = arith.constant 22 : index
    %14 = memref.load %arg1[%c22] : memref<24xf32, #tpu.memory_space<smem>>
    %c21 = arith.constant 21 : index
    %15 = memref.load %arg1[%c21] : memref<24xf32, #tpu.memory_space<smem>>
    %c2 = arith.constant 2 : index
    %16 = memref.load %arg1[%c2] : memref<24xf32, #tpu.memory_space<smem>>
    %c1_4 = arith.constant 1 : index
    %17 = memref.load %arg1[%c1_4] : memref<24xf32, #tpu.memory_space<smem>>
    %c0_5 = arith.constant 0 : index
    %18 = memref.load %arg1[%c0_5] : memref<24xf32, #tpu.memory_space<smem>>
    %c8 = arith.constant 8 : index
    %19 = memref.load %arg1[%c8] : memref<24xf32, #tpu.memory_space<smem>>
    %c7 = arith.constant 7 : index
    %20 = memref.load %arg1[%c7] : memref<24xf32, #tpu.memory_space<smem>>
    %c6 = arith.constant 6 : index
    %21 = memref.load %arg1[%c6] : memref<24xf32, #tpu.memory_space<smem>>
    %c14 = arith.constant 14 : index
    %22 = memref.load %arg1[%c14] : memref<24xf32, #tpu.memory_space<smem>>
    %c13 = arith.constant 13 : index
    %23 = memref.load %arg1[%c13] : memref<24xf32, #tpu.memory_space<smem>>
    %c12 = arith.constant 12 : index
    %24 = memref.load %arg1[%c12] : memref<24xf32, #tpu.memory_space<smem>>
    %c20 = arith.constant 20 : index
    %25 = memref.load %arg1[%c20] : memref<24xf32, #tpu.memory_space<smem>>
    %c19 = arith.constant 19 : index
    %26 = memref.load %arg1[%c19] : memref<24xf32, #tpu.memory_space<smem>>
    %c18 = arith.constant 18 : index
    %27 = memref.load %arg1[%c18] : memref<24xf32, #tpu.memory_space<smem>>
    %cst = arith.constant 0.000000e+00 : f32
    %28 = vector.broadcast %cst : f32 to vector<16x32xf32>
    %cst_6 = arith.constant 0.000000e+00 : f32
    %29 = vector.broadcast %cst_6 : f32 to vector<16x32xf32>
    %30 = vector.extract_strided_slice %1 {offsets = [0, 0, 1], sizes = [4, 16, 32], strides = [1, 1, 1]} : vector<4x16x40xf32> to vector<4x16x32xf32>
    %31 = vector.extract_strided_slice %30 {offsets = [0, 0, 0], sizes = [1, 16, 32], strides = [1, 1, 1]} : vector<4x16x32xf32> to vector<1x16x32xf32>
    %32 = vector.shape_cast %31 : vector<1x16x32xf32> to vector<16x32xf32>
    %33 = vector.broadcast %4 : f32 to vector<16x32xf32>
    %34 = arith.mulf %32, %33 : vector<16x32xf32>
    %35 = arith.addf %28, %34 : vector<16x32xf32>
    %36 = vector.broadcast %16 : f32 to vector<16x32xf32>
    %37 = arith.mulf %32, %36 : vector<16x32xf32>
    %38 = arith.addf %29, %37 : vector<16x32xf32>
    %39 = vector.extract_strided_slice %30 {offsets = [1, 0, 0], sizes = [1, 16, 32], strides = [1, 1, 1]} : vector<4x16x32xf32> to vector<1x16x32xf32>
    %40 = vector.shape_cast %39 : vector<1x16x32xf32> to vector<16x32xf32>
    %41 = vector.broadcast %7 : f32 to vector<16x32xf32>
    %42 = arith.mulf %40, %41 : vector<16x32xf32>
    %43 = arith.addf %35, %42 : vector<16x32xf32>
    %44 = vector.broadcast %19 : f32 to vector<16x32xf32>
    %45 = arith.mulf %40, %44 : vector<16x32xf32>
    %46 = arith.addf %38, %45 : vector<16x32xf32>
    %47 = vector.extract_strided_slice %30 {offsets = [2, 0, 0], sizes = [1, 16, 32], strides = [1, 1, 1]} : vector<4x16x32xf32> to vector<1x16x32xf32>
    %48 = vector.shape_cast %47 : vector<1x16x32xf32> to vector<16x32xf32>
    %49 = vector.broadcast %10 : f32 to vector<16x32xf32>
    %50 = arith.mulf %48, %49 : vector<16x32xf32>
    %51 = arith.addf %43, %50 : vector<16x32xf32>
    %52 = vector.broadcast %22 : f32 to vector<16x32xf32>
    %53 = arith.mulf %48, %52 : vector<16x32xf32>
    %54 = arith.addf %46, %53 : vector<16x32xf32>
    %55 = vector.extract_strided_slice %30 {offsets = [3, 0, 0], sizes = [1, 16, 32], strides = [1, 1, 1]} : vector<4x16x32xf32> to vector<1x16x32xf32>
    %56 = vector.shape_cast %55 : vector<1x16x32xf32> to vector<16x32xf32>
    %57 = vector.broadcast %13 : f32 to vector<16x32xf32>
    %58 = arith.mulf %56, %57 : vector<16x32xf32>
    %59 = arith.addf %51, %58 : vector<16x32xf32>
    %60 = vector.broadcast %25 : f32 to vector<16x32xf32>
    %61 = arith.mulf %56, %60 : vector<16x32xf32>
    %62 = arith.addf %54, %61 : vector<16x32xf32>
    %63 = vector.extract_strided_slice %1 {offsets = [0, 0, 2], sizes = [4, 16, 32], strides = [1, 1, 1]} : vector<4x16x40xf32> to vector<4x16x32xf32>
    %64 = vector.extract_strided_slice %63 {offsets = [0, 0, 0], sizes = [1, 16, 32], strides = [1, 1, 1]} : vector<4x16x32xf32> to vector<1x16x32xf32>
    %65 = vector.shape_cast %64 : vector<1x16x32xf32> to vector<16x32xf32>
    %66 = vector.broadcast %5 : f32 to vector<16x32xf32>
    %67 = arith.mulf %65, %66 : vector<16x32xf32>
    %68 = arith.addf %59, %67 : vector<16x32xf32>
    %69 = vector.broadcast %17 : f32 to vector<16x32xf32>
    %70 = arith.mulf %65, %69 : vector<16x32xf32>
    %71 = arith.addf %62, %70 : vector<16x32xf32>
    %72 = vector.extract_strided_slice %63 {offsets = [1, 0, 0], sizes = [1, 16, 32], strides = [1, 1, 1]} : vector<4x16x32xf32> to vector<1x16x32xf32>
    %73 = vector.shape_cast %72 : vector<1x16x32xf32> to vector<16x32xf32>
    %74 = vector.broadcast %8 : f32 to vector<16x32xf32>
    %75 = arith.mulf %73, %74 : vector<16x32xf32>
    %76 = arith.addf %68, %75 : vector<16x32xf32>
    %77 = vector.broadcast %20 : f32 to vector<16x32xf32>
    %78 = arith.mulf %73, %77 : vector<16x32xf32>
    %79 = arith.addf %71, %78 : vector<16x32xf32>
    %80 = vector.extract_strided_slice %63 {offsets = [2, 0, 0], sizes = [1, 16, 32], strides = [1, 1, 1]} : vector<4x16x32xf32> to vector<1x16x32xf32>
    %81 = vector.shape_cast %80 : vector<1x16x32xf32> to vector<16x32xf32>
    %82 = vector.broadcast %11 : f32 to vector<16x32xf32>
    %83 = arith.mulf %81, %82 : vector<16x32xf32>
    %84 = arith.addf %76, %83 : vector<16x32xf32>
    %85 = vector.broadcast %23 : f32 to vector<16x32xf32>
    %86 = arith.mulf %81, %85 : vector<16x32xf32>
    %87 = arith.addf %79, %86 : vector<16x32xf32>
    %88 = vector.extract_strided_slice %63 {offsets = [3, 0, 0], sizes = [1, 16, 32], strides = [1, 1, 1]} : vector<4x16x32xf32> to vector<1x16x32xf32>
    %89 = vector.shape_cast %88 : vector<1x16x32xf32> to vector<16x32xf32>
    %90 = vector.broadcast %14 : f32 to vector<16x32xf32>
    %91 = arith.mulf %89, %90 : vector<16x32xf32>
    %92 = arith.addf %84, %91 : vector<16x32xf32>
    %93 = vector.broadcast %26 : f32 to vector<16x32xf32>
    %94 = arith.mulf %89, %93 : vector<16x32xf32>
    %95 = arith.addf %87, %94 : vector<16x32xf32>
    %96 = vector.extract_strided_slice %1 {offsets = [0, 0, 3], sizes = [4, 16, 32], strides = [1, 1, 1]} : vector<4x16x40xf32> to vector<4x16x32xf32>
    %97 = vector.extract_strided_slice %96 {offsets = [0, 0, 0], sizes = [1, 16, 32], strides = [1, 1, 1]} : vector<4x16x32xf32> to vector<1x16x32xf32>
    %98 = vector.shape_cast %97 : vector<1x16x32xf32> to vector<16x32xf32>
    %99 = vector.broadcast %6 : f32 to vector<16x32xf32>
    %100 = arith.mulf %98, %99 : vector<16x32xf32>
    %101 = arith.addf %92, %100 : vector<16x32xf32>
    %102 = vector.broadcast %18 : f32 to vector<16x32xf32>
    %103 = arith.mulf %98, %102 : vector<16x32xf32>
    %104 = arith.addf %95, %103 : vector<16x32xf32>
    %105 = vector.extract_strided_slice %96 {offsets = [1, 0, 0], sizes = [1, 16, 32], strides = [1, 1, 1]} : vector<4x16x32xf32> to vector<1x16x32xf32>
    %106 = vector.shape_cast %105 : vector<1x16x32xf32> to vector<16x32xf32>
    %107 = vector.broadcast %9 : f32 to vector<16x32xf32>
    %108 = arith.mulf %106, %107 : vector<16x32xf32>
    %109 = arith.addf %101, %108 : vector<16x32xf32>
    %110 = vector.broadcast %21 : f32 to vector<16x32xf32>
    %111 = arith.mulf %106, %110 : vector<16x32xf32>
    %112 = arith.addf %104, %111 : vector<16x32xf32>
    %113 = vector.extract_strided_slice %96 {offsets = [2, 0, 0], sizes = [1, 16, 32], strides = [1, 1, 1]} : vector<4x16x32xf32> to vector<1x16x32xf32>
    %114 = vector.shape_cast %113 : vector<1x16x32xf32> to vector<16x32xf32>
    %115 = vector.broadcast %12 : f32 to vector<16x32xf32>
    %116 = arith.mulf %114, %115 : vector<16x32xf32>
    %117 = arith.addf %109, %116 : vector<16x32xf32>
    %118 = vector.broadcast %24 : f32 to vector<16x32xf32>
    %119 = arith.mulf %114, %118 : vector<16x32xf32>
    %120 = arith.addf %112, %119 : vector<16x32xf32>
    %121 = vector.extract_strided_slice %96 {offsets = [3, 0, 0], sizes = [1, 16, 32], strides = [1, 1, 1]} : vector<4x16x32xf32> to vector<1x16x32xf32>
    %122 = vector.shape_cast %121 : vector<1x16x32xf32> to vector<16x32xf32>
    %123 = vector.broadcast %15 : f32 to vector<16x32xf32>
    %124 = arith.mulf %122, %123 : vector<16x32xf32>
    %125 = arith.addf %117, %124 : vector<16x32xf32>
    %126 = vector.broadcast %27 : f32 to vector<16x32xf32>
    %127 = arith.mulf %122, %126 : vector<16x32xf32>
    %128 = arith.addf %120, %127 : vector<16x32xf32>
    %129 = vector.extract_strided_slice %125 {offsets = [0, 0], sizes = [15, 32], strides = [1, 1]} : vector<16x32xf32> to vector<15x32xf32>
    %130 = vector.broadcast %2 : f32 to vector<15x32xf32>
    %131 = arith.addf %129, %130 : vector<15x32xf32>
    %cst_7 = arith.constant 5.000000e-01 : f32
    %132 = vector.broadcast %cst_7 : f32 to vector<15x32xf32>
    %133 = arith.mulf %131, %132 : vector<15x32xf32>
    %134 = arith.mulf %131, %131 : vector<15x32xf32>
    %135 = arith.mulf %134, %131 : vector<15x32xf32>
    %cst_8 = arith.constant 4.471500e-02 : f32
    %136 = vector.broadcast %cst_8 : f32 to vector<15x32xf32>
    %137 = arith.mulf %135, %136 : vector<15x32xf32>
    %138 = arith.addf %131, %137 : vector<15x32xf32>
    %cst_9 = arith.constant 0.797884583 : f32
    %139 = vector.broadcast %cst_9 : f32 to vector<15x32xf32>
    %140 = arith.mulf %138, %139 : vector<15x32xf32>
    %141 = math.tanh %140 : vector<15x32xf32>
    %cst_10 = arith.constant 1.000000e+00 : f32
    %142 = vector.broadcast %cst_10 : f32 to vector<15x32xf32>
    %143 = arith.addf %141, %142 : vector<15x32xf32>
    %144 = arith.mulf %133, %143 : vector<15x32xf32>
    %c0_11 = arith.constant 0 : index
    %c0_12 = arith.constant 0 : index
    %c0_13 = arith.constant 0 : index
    %c0_14 = arith.constant 0 : index
    %145 = vector.load %arg4[%c0_11, %c0_12, %c0_13, %c0_14] : memref<1x3x15x32xf32, #tpu.memory_space<vmem>>, vector<1x1x15x32xf32>
    %146 = vector.shape_cast %145 : vector<1x1x15x32xf32> to vector<15x32xf32>
    %147 = vector.shape_cast %144 : vector<15x32xf32> to vector<1x1x15x32xf32>
    tpu.vector_store %arg4[%c0_11, %c0_12, %c0_13, %c0_14], %147 {strides = array<i32>} : memref<1x3x15x32xf32, #tpu.memory_space<vmem>>, vector<1x1x15x32xf32>,
    %148 = vector.broadcast %3 : f32 to vector<15x32xf32>
    %c0_15 = arith.constant 0 : index
    %c1_16 = arith.constant 1 : index
    %c0_17 = arith.constant 0 : index
    %c0_18 = arith.constant 0 : index
    %149 = vector.load %arg4[%c0_15, %c1_16, %c0_17, %c0_18] : memref<1x3x15x32xf32, #tpu.memory_space<vmem>>, vector<1x1x15x32xf32>
    %150 = vector.shape_cast %149 : vector<1x1x15x32xf32> to vector<15x32xf32>
    %151 = vector.shape_cast %148 : vector<15x32xf32> to vector<1x1x15x32xf32>
    tpu.vector_store %arg4[%c0_15, %c1_16, %c0_17, %c0_18], %151 {strides = array<i32>} : memref<1x3x15x32xf32, #tpu.memory_space<vmem>>, vector<1x1x15x32xf32>,
    %152 = vector.extract_strided_slice %128 {offsets = [1, 0], sizes = [15, 32], strides = [1, 1]} : vector<16x32xf32> to vector<15x32xf32>
    %153 = vector.broadcast %2 : f32 to vector<15x32xf32>
    %154 = arith.addf %152, %153 : vector<15x32xf32>
    %cst_19 = arith.constant 5.000000e-01 : f32
    %155 = vector.broadcast %cst_19 : f32 to vector<15x32xf32>
    %156 = arith.mulf %154, %155 : vector<15x32xf32>
    %157 = arith.mulf %154, %154 : vector<15x32xf32>
    %158 = arith.mulf %157, %154 : vector<15x32xf32>
    %cst_20 = arith.constant 4.471500e-02 : f32
    %159 = vector.broadcast %cst_20 : f32 to vector<15x32xf32>
    %160 = arith.mulf %158, %159 : vector<15x32xf32>
    %161 = arith.addf %154, %160 : vector<15x32xf32>
    %cst_21 = arith.constant 0.797884583 : f32
    %162 = vector.broadcast %cst_21 : f32 to vector<15x32xf32>
    %163 = arith.mulf %161, %162 : vector<15x32xf32>
    %164 = math.tanh %163 : vector<15x32xf32>
    %cst_22 = arith.constant 1.000000e+00 : f32
    %165 = vector.broadcast %cst_22 : f32 to vector<15x32xf32>
    %166 = arith.addf %164, %165 : vector<15x32xf32>
    %167 = arith.mulf %156, %166 : vector<15x32xf32>
    %c0_23 = arith.constant 0 : index
    %c2_24 = arith.constant 2 : index
    %c0_25 = arith.constant 0 : index
    %c0_26 = arith.constant 0 : index
    %168 = vector.load %arg4[%c0_23, %c2_24, %c0_25, %c0_26] : memref<1x3x15x32xf32, #tpu.memory_space<vmem>>, vector<1x1x15x32xf32>
    %169 = vector.shape_cast %168 : vector<1x1x15x32xf32> to vector<15x32xf32>
    %170 = vector.shape_cast %167 : vector<15x32xf32> to vector<1x1x15x32xf32>
    tpu.vector_store %arg4[%c0_23, %c2_24, %c0_25, %c0_26], %170 {strides = array<i32>} : memref<1x3x15x32xf32, #tpu.memory_space<vmem>>, vector<1x1x15x32xf32>,
    return
  }
  func.func @transform_0(%arg0: i32) -> i32 {
    %c0_i32 = arith.constant 0 : i32
    %c0_i32_0 = arith.constant 0 : i32
    return %c0_i32 : i32
  }
  func.func @transform_1(%arg0: i32) -> i32 {
    %c0_i32 = arith.constant 0 : i32
    %c0_i32_0 = arith.constant 0 : i32
    return %c0_i32 : i32
  }
  func.func @transform_2(%arg0: i32) -> (i32, i32, i32, i32) {
    %c0_i32 = arith.constant 0 : i32
    %c0_i32_0 = arith.constant 0 : i32
    %c0_i32_1 = arith.constant 0 : i32
    %c0_i32_2 = arith.constant 0 : i32
    return %arg0, %c0_i32, %c0_i32_0, %c0_i32_1 : i32, i32, i32, i32
  }
  func.func @transform_3(%arg0: i32) -> (i32, i32, i32, i32) {
    %c0_i32 = arith.constant 0 : i32
    %c0_i32_0 = arith.constant 0 : i32
    %c0_i32_1 = arith.constant 0 : i32
    %c0_i32_2 = arith.constant 0 : i32
    return %arg0, %c0_i32, %c0_i32_0, %c0_i32_1 : i32, i32, i32, i32
  }
}

</mosaic_0001>

<llo_original>
// kernel: tpu_custom_call.1
$region0: #{tpu_custom_call.1}
  #allocation0 [shape = 'u32[]', space=smem, size = 0x4, offset = 0x4, fixed_abs, tag = 'smem constant byte address 0x4 - core index']
  #allocation1 [shape = 'u32[144,128]{1,0:T(1,128)}', space=vmem, size = 0x12000, scoped, tag = 'internal scratch']
  %s0 = inlined_call_operand.hbm [shape: f32[24], index: 0, kind: input, shape index: {}]
  %s1 = inlined_call_operand.vmem [shape: f32[2], index: 1, kind: input, shape index: {}]
  %s2 = inlined_call_operand.hbm [shape: f32[1,4,16,40], index: 2, kind: input, shape index: {}]
  %s3 = inlined_call_operand.vmem [shape: f32[1,3,15,32], index: 3, kind: output, shape index: {}]
  %s4 = sld [smem:[#allocation0]]
  $region34: #{tpu_custom_call.1} parent=0
    _
  %s6 = ssub.s32 1, %s4
  %s7 = scalar_select 0, %s6, %s4
  $region1: #{tpu_custom_call.1} parent=0
    #allocation2 [shape = 'u8[512]{0}', space=smem, size = 0x200, scoped, tag = 'input window, operand 0, single buffered']
    #allocation3 [shape = 's32[1]{0}', space=sflag, size = 0x4, scoped, tag = 'scoped memory for tpu_custom_call.1']
    #allocation4 [shape = 's32[1]{0}', space=sflag, size = 0x4, scoped, tag = 'scoped memory for tpu_custom_call.1']
    #allocation5 [shape = 's32[1]{0}', space=sflag, size = 0x4, scoped, tag = 'scoped memory for tpu_custom_call.1']
    #allocation6 [shape = 'u8[512]{0}', space=smem, size = 0x200, scoped, tag = 'input window, operand 1, single buffered']
    #allocation7 [shape = 'u8[32768]{0}', space=vmem, size = 0x8000, scoped, tag = 'input window, operand 2, single buffered']
    %8 = vsyncpa [#allocation4], 0
    %9 = vsyncpa [#allocation5], 0
    %10 = vsyncpa [#allocation3], 0
    // Predicated region
    $region2: #{tpu_custom_call.1} parent=1 // pred_check
      _
    $region3: #{tpu_custom_call.1} parent=1 // pred_check_branch
      %12 = sbr.rel (0) target = $region5
    $region4: #{tpu_custom_call.1} parent=1 // pred_region
      %s14 = ssub.s32 16, 16
      %15 = vsyncadd [#allocation4], %s14
      %18 = dma.hbm_to_smem %s0, 16, [#allocation2], [#allocation4]
    $region5: #{tpu_custom_call.1} parent=1 // pred_fallthru
      _
    // Predicated region
    $region6: #{tpu_custom_call.1} parent=1 // pred_check
      _
    $region7: #{tpu_custom_call.1} parent=1 // pred_check_branch
      %20 = sbr.rel (0) target = $region9
    $region8: #{tpu_custom_call.1} parent=1 // pred_region
      %s22 = ssub.s32 16, 16
      %23 = vsyncadd [#allocation5], %s22
      %s25 = sshll.u32 %s1, 4
      %s26 = int_to_ptr.vmem [resolvable:$true] %s25
      %28 = dma.vmem_to_smem %s26, 16, [#allocation6], [#allocation5]
    $region9: #{tpu_custom_call.1} parent=1 // pred_fallthru
      _
    // Predicated region
    $region10: #{tpu_custom_call.1} parent=1 // pred_check
      _
    $region11: #{tpu_custom_call.1} parent=1 // pred_check_branch
      %30 = sbr.rel (0) target = $region13
    $region12: #{tpu_custom_call.1} parent=1 // pred_region
      %s32 = ssub.s32 1024, 1024
      %33 = vsyncadd [#allocation3], %s32
      %s34 = sshll.u32 [#allocation7], 4
      %s35 = int_to_ptr.vmem [resolvable:$true] %s34
      %40 = dma.hbm_to_vmem [thread:$0]  %s2, 1024, %s35, [#allocation3], 128, 128, 8
    $region13: #{tpu_custom_call.1} parent=1 // pred_fallthru
      _
    // Predicated region
    $region14: #{tpu_custom_call.1} parent=1 // pred_check
      _
    $region15: #{tpu_custom_call.1} parent=1 // pred_check_branch
      %42 = sbr.rel (0) target = $region17
    $region16: #{tpu_custom_call.1} parent=1 // pred_region
      %43 = dma.done [#allocation4], 16
    $region17: #{tpu_custom_call.1} parent=1 // pred_fallthru
      _
    // Predicated region
    $region18: #{tpu_custom_call.1} parent=1 // pred_check
      _
    $region19: #{tpu_custom_call.1} parent=1 // pred_check_branch
      %45 = sbr.rel (0) target = $region21
    $region20: #{tpu_custom_call.1} parent=1 // pred_region
      %46 = dma.done [#allocation5], 16
    $region21: #{tpu_custom_call.1} parent=1 // pred_fallthru
      _
    // Predicated region
    $region22: #{tpu_custom_call.1} parent=1 // pred_check
      _
    $region23: #{tpu_custom_call.1} parent=1 // pred_check_branch
      %48 = sbr.rel (0) target = $region25
    $region24: #{tpu_custom_call.1} parent=1 // pred_region
      %49 = dma.done [#allocation3], 1024
    $region25: #{tpu_custom_call.1} parent=1 // pred_fallthru
      _
    %50 = sfence
    %v51 = vld [vmem:[#allocation7] sm:$0xff]
    %v52 = vld [vmem:[#allocation7 + $0x8] sm:$0xff]
    %v53 = vld [vmem:[#allocation7 + $0x10] sm:$0xff]
    %v54 = vld [vmem:[#allocation7 + $0x18] sm:$0xff]
    %v55 = vld [vmem:[#allocation7 + $0x20] sm:$0xff]
    %v56 = vld [vmem:[#allocation7 + $0x28] sm:$0xff]
    %v57 = vld [vmem:[#allocation7 + $0x30] sm:$0xff]
    %v58 = vld [vmem:[#allocation7 + $0x38] sm:$0xff]
    %s59 = sld [smem:[#allocation6]]
    %s60 = sld [smem:[#allocation6 + $0x1]]
    %s61 = sld [smem:[#allocation2 + $0x5]]
    %s62 = sld [smem:[#allocation2 + $0x4]]
    %s63 = sld [smem:[#allocation2 + $0x3]]
    %s64 = sld [smem:[#allocation2 + $0xb]]
    %s65 = sld [smem:[#allocation2 + $0xa]]
    %s66 = sld [smem:[#allocation2 + $0x9]]
    %s67 = sld [smem:[#allocation2 + $0x11]]
    %s68 = sld [smem:[#allocation2 + $0x10]]
    %s69 = sld [smem:[#allocation2 + $0xf]]
    %s70 = sld [smem:[#allocation2 + $0x17]]
    %s71 = sld [smem:[#allocation2 + $0x16]]
    %s72 = sld [smem:[#allocation2 + $0x15]]
    %s73 = sld [smem:[#allocation2 + $0x2]]
    %s74 = sld [smem:[#allocation2 + $0x1]]
    %s75 = sld [smem:[#allocation2]]
    %s76 = sld [smem:[#allocation2 + $0x8]]
    %s77 = sld [smem:[#allocation2 + $0x7]]
    %s78 = sld [smem:[#allocation2 + $0x6]]
    %s79 = sld [smem:[#allocation2 + $0xe]]
    %s80 = sld [smem:[#allocation2 + $0xd]]
    %s81 = sld [smem:[#allocation2 + $0xc]]
    %s82 = sld [smem:[#allocation2 + $0x14]]
    %s83 = sld [smem:[#allocation2 + $0x13]]
    %s84 = sld [smem:[#allocation2 + $0x12]]
    %v85 = vstv %s61
    %v86 = vmul.f32 %v51, %v85
    %v87 = vmul.f32 %v52, %v85
    %v88 = vadd.f32 %v86, 0.0
    %v89 = vadd.f32 %v87, 0.0
    %v90 = vstv %s73
    %v91 = vmul.f32 %v51, %v90
    %v92 = vmul.f32 %v52, %v90
    %v93 = vadd.f32 %v91, 0.0
    %v94 = vadd.f32 %v92, 0.0
    %v95 = vstv %s64
    %v96 = vmul.f32 %v53, %v95
    %v97 = vmul.f32 %v54, %v95
    %v98 = vadd.f32 %v88, %v96
    %v99 = vadd.f32 %v89, %v97
    %v100 = vstv %s76
    %v101 = vmul.f32 %v53, %v100
    %v102 = vmul.f32 %v54, %v100
    %v103 = vadd.f32 %v93, %v101
    %v104 = vadd.f32 %v94, %v102
    %v105 = vstv %s67
    %v106 = vmul.f32 %v55, %v105
    %v107 = vmul.f32 %v56, %v105
    %v108 = vadd.f32 %v98, %v106
    %v109 = vadd.f32 %v99, %v107
    %v110 = vstv %s79
    %v111 = vmul.f32 %v55, %v110
    %v112 = vmul.f32 %v56, %v110
    %v113 = vadd.f32 %v103, %v111
    %v114 = vadd.f32 %v104, %v112
    %v115 = vstv %s70
    %v116 = vmul.f32 %v57, %v115
    %v117 = vmul.f32 %v58, %v115
    %v118 = vadd.f32 %v108, %v116
    %v119 = vadd.f32 %v109, %v117
    %v120 = vstv %s82
    %v121 = vmul.f32 %v57, %v120
    %v122 = vmul.f32 %v58, %v120
    %v123 = vadd.f32 %v113, %v121
    %v124 = vadd.f32 %v114, %v122
    %v125 = vstv %s62
    %v126 = vmul.f32 %v51, %v125
    %v127 = vmul.f32 %v52, %v125
    %130 = vrot.lane.b32.xlu0 %v126, 127
    %v131 = vpop.permute.xlu0 %130
    %132 = vrot.lane.b32.xlu0 %v127, 127
    %v133 = vpop.permute.xlu0 %132
    %v136 = vadd.f32 %v118, %v131
    %v137 = vadd.f32 %v119, %v133
    %v138 = vstv %s74
    %v139 = vmul.f32 %v51, %v138
    %v140 = vmul.f32 %v52, %v138
    %143 = vrot.lane.b32.xlu0 %v139, 127
    %v144 = vpop.permute.xlu0 %143
    %145 = vrot.lane.b32.xlu0 %v140, 127
    %v146 = vpop.permute.xlu0 %145
    %v149 = vadd.f32 %v123, %v144
    %v150 = vadd.f32 %v124, %v146
    %v151 = vstv %s65
    %v152 = vmul.f32 %v53, %v151
    %v153 = vmul.f32 %v54, %v151
    %156 = vrot.lane.b32.xlu0 %v152, 127
    %v157 = vpop.permute.xlu0 %156
    %158 = vrot.lane.b32.xlu0 %v153, 127
    %v159 = vpop.permute.xlu0 %158
    %v162 = vadd.f32 %v136, %v157
    %v163 = vadd.f32 %v137, %v159
    %v164 = vstv %s77
    %v165 = vmul.f32 %v53, %v164
    %v166 = vmul.f32 %v54, %v164
    %169 = vrot.lane.b32.xlu0 %v165, 127
    %v170 = vpop.permute.xlu0 %169
    %171 = vrot.lane.b32.xlu0 %v166, 127
    %v172 = vpop.permute.xlu0 %171
    %v175 = vadd.f32 %v149, %v170
    %v176 = vadd.f32 %v150, %v172
    %v177 = vstv %s68
    %v178 = vmul.f32 %v55, %v177
    %v179 = vmul.f32 %v56, %v177
    %182 = vrot.lane.b32.xlu0 %v178, 127
    %v183 = vpop.permute.xlu0 %182
    %184 = vrot.lane.b32.xlu0 %v179, 127
    %v185 = vpop.permute.xlu0 %184
    %v188 = vadd.f32 %v162, %v183
    %v189 = vadd.f32 %v163, %v185
    %v190 = vstv %s80
    %v191 = vmul.f32 %v55, %v190
    %v192 = vmul.f32 %v56, %v190
    %195 = vrot.lane.b32.xlu0 %v191, 127
    %v196 = vpop.permute.xlu0 %195
    %197 = vrot.lane.b32.xlu0 %v192, 127
    %v198 = vpop.permute.xlu0 %197
    %v201 = vadd.f32 %v175, %v196
    %v202 = vadd.f32 %v176, %v198
    %v203 = vstv %s71
    %v204 = vmul.f32 %v57, %v203
    %v205 = vmul.f32 %v58, %v203
    %208 = vrot.lane.b32.xlu0 %v204, 127
    %v209 = vpop.permute.xlu0 %208
    %210 = vrot.lane.b32.xlu0 %v205, 127
    %v211 = vpop.permute.xlu0 %210
    %v214 = vadd.f32 %v188, %v209
    %v215 = vadd.f32 %v189, %v211
    %v216 = vstv %s83
    %v217 = vmul.f32 %v57, %v216
    %v218 = vmul.f32 %v58, %v216
    %221 = vrot.lane.b32.xlu0 %v217, 127
    %v222 = vpop.permute.xlu0 %221
    %223 = vrot.lane.b32.xlu0 %v218, 127
    %v224 = vpop.permute.xlu0 %223
    %v227 = vadd.f32 %v201, %v222
    %v228 = vadd.f32 %v202, %v224
    %v229 = vstv %s63
    %v230 = vmul.f32 %v51, %v229
    %v231 = vmul.f32 %v52, %v229
    %234 = vrot.lane.b32.xlu0 %v230, 126
    %v235 = vpop.permute.xlu0 %234
    %236 = vrot.lane.b32.xlu0 %v231, 126
    %v237 = vpop.permute.xlu0 %236
    %v240 = vadd.f32 %v214, %v235
    %v241 = vadd.f32 %v215, %v237
    %v242 = vstv %s75
    %v243 = vmul.f32 %v51, %v242
    %v244 = vmul.f32 %v52, %v242
    %247 = vrot.lane.b32.xlu0 %v243, 126
    %v248 = vpop.permute.xlu0 %247
    %249 = vrot.lane.b32.xlu0 %v244, 126
    %v250 = vpop.permute.xlu0 %249
    %v253 = vadd.f32 %v227, %v248
    %v254 = vadd.f32 %v228, %v250
    %v255 = vstv %s66
    %v256 = vmul.f32 %v53, %v255
    %v257 = vmul.f32 %v54, %v255
    %260 = vrot.lane.b32.xlu0 %v256, 126
    %v261 = vpop.permute.xlu0 %260
    %262 = vrot.lane.b32.xlu0 %v257, 126
    %v263 = vpop.permute.xlu0 %262
    %v266 = vadd.f32 %v240, %v261
    %v267 = vadd.f32 %v241, %v263
    %v268 = vstv %s78
    %v269 = vmul.f32 %v53, %v268
    %v270 = vmul.f32 %v54, %v268
    %273 = vrot.lane.b32.xlu0 %v269, 126
    %v274 = vpop.permute.xlu0 %273
    %275 = vrot.lane.b32.xlu0 %v270, 126
    %v276 = vpop.permute.xlu0 %275
    %v279 = vadd.f32 %v253, %v274
    %v280 = vadd.f32 %v254, %v276
    %v281 = vstv %s69
    %v282 = vmul.f32 %v55, %v281
    %v283 = vmul.f32 %v56, %v281
    %286 = vrot.lane.b32.xlu0 %v282, 126
    %v287 = vpop.permute.xlu0 %286
    %288 = vrot.lane.b32.xlu0 %v283, 126
    %v289 = vpop.permute.xlu0 %288
    %v292 = vadd.f32 %v266, %v287
    %v293 = vadd.f32 %v267, %v289
    %v294 = vstv %s81
    %v295 = vmul.f32 %v55, %v294
    %v296 = vmul.f32 %v56, %v294
    %299 = vrot.lane.b32.xlu0 %v295, 126
    %v300 = vpop.permute.xlu0 %299
    %301 = vrot.lane.b32.xlu0 %v296, 126
    %v302 = vpop.permute.xlu0 %301
    %v305 = vadd.f32 %v279, %v300
    %v306 = vadd.f32 %v280, %v302
    %v307 = vstv %s72
    %v308 = vmul.f32 %v57, %v307
    %v309 = vmul.f32 %v58, %v307
    %312 = vrot.lane.b32.xlu0 %v308, 126
    %v313 = vpop.permute.xlu0 %312
    %314 = vrot.lane.b32.xlu0 %v309, 126
    %v315 = vpop.permute.xlu0 %314
    %v318 = vadd.f32 %v292, %v313
    %v319 = vadd.f32 %v293, %v315
    %v320 = vstv %s84
    %v321 = vmul.f32 %v57, %v320
    %v322 = vmul.f32 %v58, %v320
    %325 = vrot.lane.b32.xlu0 %v321, 126
    %v326 = vpop.permute.xlu0 %325
    %327 = vrot.lane.b32.xlu0 %v322, 126
    %v328 = vpop.permute.xlu0 %327
    %v331 = vadd.f32 %v305, %v326
    %v332 = vadd.f32 %v306, %v328
    %v333 = vstv %s59
    %v334 = vadd.f32 %v318, %v333
    %v335 = vadd.f32 %v319, %v333
    %v336 = vmul.f32 %v334, 0.5
    %v337 = vmul.f32 %v335, 0.5
    %v338 = vmul.f32 %v334, %v334
    %v339 = vmul.f32 %v335, %v335
    %v340 = vmul.f32 %v338, %v334
    %v341 = vmul.f32 %v339, %v335
    %v342 = vmul.f32 %v340, 0.044715
    %v343 = vmul.f32 %v341, 0.044715
    %v344 = vadd.f32 %v334, %v342
    %v345 = vadd.f32 %v335, %v343
    %v346 = vmul.f32 %v344, 0.7978846
    %v347 = vmul.f32 %v345, 0.7978846
    %v348 = vtanh.pop %v346
    %v349 = vtanh.pop %v347
    %v350 = vadd.f32 %v348, 1.0
    %v351 = vadd.f32 %v349, 1.0
    %v352 = vmul.f32 %v336, %v350
    %v353 = vmul.f32 %v337, %v351
    %356 = vrot.lane.b32.xlu0 %v352, 127
    %v357 = vpop.permute.xlu0 %356
    %358 = vrot.lane.b32.xlu0 %v353, 127
    %v359 = vpop.permute.xlu0 %358
    %vm362 = vcmask 261120
    %363 = vst.msk [vmem:[%s3] sm:$0xff] %vm362, %v357
    %vm364 = vcmask 260096
    %365 = vst.msk [vmem:[%s3 + $0x8] sm:$0x7f] %vm364, %v359
    %v366 = vstv %s60
    %s367 = scalar_lea.vmem %s3, 16
    %368 = vst.msk [vmem:[%s367] sm:$0xff] %vm362, %v366
    %369 = vst.msk [vmem:[%s367 + $0x8] sm:$0x7f] %vm364, %v366
    %v370 = vadd.f32 %v331, %v333
    %v371 = vadd.f32 %v332, %v333
    %v372 = vmul.f32 %v370, 0.5
    %v373 = vmul.f32 %v371, 0.5
    %v374 = vmul.f32 %v370, %v370
    %v375 = vmul.f32 %v371, %v371
    %v376 = vmul.f32 %v374, %v370
    %v377 = vmul.f32 %v375, %v371
    %v378 = vmul.f32 %v376, 0.044715
    %v379 = vmul.f32 %v377, 0.044715
    %v380 = vadd.f32 %v370, %v378
    %v381 = vadd.f32 %v371, %v379
    %v382 = vmul.f32 %v380, 0.7978846
    %v383 = vmul.f32 %v381, 0.7978846
    %v384 = vtanh.pop %v382
    %v385 = vtanh.pop %v383
    %v386 = vadd.f32 %v384, 1.0
    %v387 = vadd.f32 %v385, 1.0
    %v388 = vmul.f32 %v372, %v386
    %v389 = vmul.f32 %v373, %v387
    %392 = vrot.lane.b32.xlu0 %v388, 127
    %v393 = vpop.permute.xlu0 %392
    %394 = vrot.lane.b32.xlu0 %v389, 127
    %v395 = vpop.permute.xlu0 %394
    %s398 = scalar_lea.vmem %s3, 32
    %vm399 = vcmask 261121
    %400 = vst.msk [vmem:[%s398 - $0x1] sm:$0xfe] %vm399, %v393
    %401 = vst.msk [vmem:[%s398 + $0x7] sm:$0xff] %vm362, %v395
    // Predicated region
    $region26: #{tpu_custom_call.1} parent=1 // pred_check
      _
    $region27: #{tpu_custom_call.1} parent=1 // pred_check_branch
      %403 = sbr.rel (0) target = $region29
    $region28: #{tpu_custom_call.1} parent=1 // pred_region
      _
    $region29: #{tpu_custom_call.1} parent=1 // pred_fallthru
      _
    // Predicated region
    $region30: #{tpu_custom_call.1} parent=1 // pred_check
      _
    $region31: #{tpu_custom_call.1} parent=1 // pred_check_branch
      %405 = sbr.rel (0) target = $region33
    $region32: #{tpu_custom_call.1} parent=1 // pred_region
      _
    $region33: #{tpu_custom_call.1} parent=1 // pred_fallthru
      _
    %406 = vsyncpa [#allocation3], 1
    %407 = vsyncpa [#allocation4], 1
    %408 = vsyncpa [#allocation5], 1

</llo_original>
